<compile_context>
chip_gen: v6e
topology: v6e:2x2x1
jax: 0.10.0
libtpu: 0.0.40
codegen_flags: <defaults>
</compile_context>

<pallas_src>
import functools

import jax
import jax.numpy as jnp
import numpy as np
from jax.experimental import pallas as pl
from jax.experimental.pallas import tpu as pltpu


_DEFAULT_TARGET_BLOCK_BYTES = 4 * 1024 * 1024  # ~4 MiB: past the ~85% DMA knee on
# v5e/v6e, well above the ~0.35us/step overhead on v7x; 2x (double buffered) +
# outputs + scratch still fits every generation's scoped-VMEM default.
# TODO(synk): if production W*itemsize < 512 B, the (8,128) VMEM tiling leaves most
# lanes empty per DMA line; a lane-dense (B, H*W) segmented-reduce layout would help.


# ----------------------------------------------------------------------------- kernels


def _pool_reduce_h_kernel(*refs, TH, H, W_out, k, inv_scale, has_sel, ragged):
    """dim_to_pool == 2: full reduction over H, k-window (stride s0) pooling over W.

    Grid: (B blocks, H blocks).  refs = (x, [sel,] out, acc):
      x   : (TB, TH, W) input tile
      sel : (W, W_out) one-hot window/stride selection matrix (only when s0 > 1)
      out : (TB, W_out) output tile (written on the last H step)
      acc : (TB, W) f32 VMEM accumulator of per-column sums over H
    """
    if has_sel:
        x_ref, sel_ref, o_ref, acc_ref = refs
    else:
        x_ref, o_ref, acc_ref = refs
        sel_ref = None
    h = pl.program_id(1)

    @pl.when(h == 0)
    def _init():
        acc_ref[...] = jnp.zeros_like(acc_ref)

    x = x_ref[...]                                            # (TB, TH, W), input dtype
    if ragged:  # last H block extends past H: zero the out-of-range rows
        rows = jax.lax.broadcasted_iota(jnp.int32, x.shape, 1)
        x = jnp.where(h * TH + rows < H, x, jnp.zeros_like(x))
    # Widening reduction: accumulate in f32 without materializing a full f32 copy.
    acc_ref[...] += jnp.sum(x, axis=1, dtype=jnp.float32)      # (TB, W)

    @pl.when(h == pl.num_programs(1) - 1)
    def _finalize():
        col = acc_ref[...]                                     # (TB, W) f32 column sums
        if has_sel:
            # stride > 1: window selection as a tiny one-hot matmul (MXU is idle).
            win = jnp.dot(col, sel_ref[...],
                          preferred_element_type=jnp.float32,
                          precision=jax.lax.Precision.HIGHEST)
        elif k == 1:
            win = col                                          # W_out == W
        else:
            # k > 1, stride 1: contiguous slice-adds (XLU/VPU slack at mem-bound).
            win = col[:, 0:W_out]
            for j in range(1, k):
                win = win + col[:, j:j + W_out]
        o_ref[...] = (win * inv_scale).astype(o_ref.dtype)


def _pool_reduce_w_kernel(*refs, TW, W, inv_w, has_sel, ragged):
    """dim_to_pool != 2: mean over all of W per row; stride-s0 row selection.

    Grid: (B blocks, W blocks).  refs = (x, [sel,] out, acc):
      x   : (TB, H, TW) input tile
      sel : (H, H_out) one-hot row-selection matrix (only when s0 > 1)
      out : (TB, H_out) output tile (written on the last W step)
      acc : (TB, H) f32 VMEM accumulator of per-row sums over W
    """
    if has_sel:
        x_ref, sel_ref, o_ref, acc_ref = refs
    else:
        x_ref, o_ref, acc_ref = refs
        sel_ref = None
    w = pl.program_id(1)

    @pl.when(w == 0)
    def _init():
        acc_ref[...] = jnp.zeros_like(acc_ref)

    x = x_ref[...]                                            # (TB, H, TW)
    if ragged:  # last W block extends past W: zero the out-of-range lanes
        lanes = jax.lax.broadcasted_iota(jnp.int32, x.shape, 2)
        x = jnp.where(w * TW + lanes < W, x, jnp.zeros_like(x))
    acc_ref[...] += jnp.sum(x, axis=2, dtype=jnp.float32)      # (TB, H)

    @pl.when(w == pl.num_programs(1) - 1)
    def _finalize():
        rows = acc_ref[...]                                    # (TB, H) f32 row sums
        if has_sel:
            rows = jnp.dot(rows, sel_ref[...],
                           preferred_element_type=jnp.float32,
                           precision=jax.lax.Precision.HIGHEST)
        o_ref[...] = (rows * inv_w).astype(o_ref.dtype)


# -------------------------------------------------------------------------- planning


def _pick_tb(B, cap):
    """Batch-tile size along the flattened N*C axis.

    Multiple of 8 (output sublane alignment; ragged last block is fine) unless it
    equals B; when B is large enough, capped so the "parallel" B axis has >= 2 grid
    steps and both of v7x's TensorCores get work.
    """
    cap = max(1, min(B, cap))
    tb = B if cap >= B else max(8, (cap // 8) * 8)
    if tb >= B and B >= 16:
        tb = max(8, ((B // 2) // 8) * 8)
    return min(tb, B)


def _plan_dim2(B, H, W, itemsize, target):
    """(TB, TH) for input blocks (TB, TH, W); TH tiles the H reduction axis."""
    slab = H * W * itemsize
    if slab * min(8, B) <= target:
        return _pick_tb(B, target // slab), H            # full-H blocks, batch slabs
    tb = B if B < 8 else 8                               # large slab: tile H instead
    th = max(8, (target // max(1, tb * W * itemsize)) // 8 * 8)
    return tb, min(th, H)


def _plan_dim3(B, H, W, itemsize, target):
    """(TB, TW) for input blocks (TB, H, TW); TW tiles the W reduction axis."""
    slab = H * W * itemsize
    if slab * min(8, B) <= target:
        return _pick_tb(B, target // slab), W
    tb = B if B < 8 else 8
    tw = max(128, (target // max(1, tb * H * itemsize)) // 128 * 128)
    # TODO(synk): huge-H, small-W (< 128) slabs are not W-tiled; they fall back to a
    # single full-W block and rely on the computed vmem_limit_bytes below.
    return tb, min(tw, W)


def _selection_matrix(L, L_out, k, s0):
    """One-hot window matrix S[L, L_out]: S[i, o] = 1 iff o*s0 <= i < o*s0 + k."""
    i = np.arange(L)[:, None]
    o = np.arange(L_out)[None, :]
    return jnp.asarray(((i >= o * s0) & (i < o * s0 + k)).astype(np.float32))


# --------------------------------------------------------------------------- wrapper


def avg_pool_2d_variable_input(x, dim_to_pool, kernel_size=1, stride=(1, 1),
                               padding=(0, 0), *,
                               target_block_bytes=_DEFAULT_TARGET_BLOCK_BYTES):
    """Pallas implementation of AvgPool2dVariableInput.forward for NCHW `x`."""
    # TODO(synk): nonzero `padding` (AvgPool2d zero padding / count_include_pad) not implemented.
    assert padding == (0, 0), "padding != (0, 0) not supported"
    assert kernel_size >= 1 and stride[0] >= 1, "kernel_size/stride must be >= 1"
    N, C, H, W = x.shape
    B = N * C
    s0, _s1 = stride  # _s1 is provably irrelevant (second output spatial dim is always 1)
    itemsize = x.dtype.itemsize
    xf = x.reshape(B, H, W)

    inputs = [xf]
    sel_bytes = 0
    has_sel = s0 > 1
    if dim_to_pool == 2:
        assert kernel_size <= W, "kernel_size > W yields an empty output"
        out_cols = (W - kernel_size) // s0 + 1                  # W_out
        TB, TR = _plan_dim2(B, H, W, itemsize, target_block_bytes)
        in_specs = [pl.BlockSpec((TB, TR, W), lambda b, r: (b, r, 0))]
        if has_sel:
            sel = _selection_matrix(W, out_cols, kernel_size, s0)
            inputs.append(sel)
            in_specs.append(pl.BlockSpec((W, out_cols), lambda b, r: (0, 0)))
            sel_bytes = int(sel.size) * 4
        kernel = functools.partial(
            _pool_reduce_h_kernel, TH=TR, H=H, W_out=out_cols, k=kernel_size,
            inv_scale=1.0 / float(kernel_size * H), has_sel=has_sel,
            ragged=(H % TR != 0))
        n_red = pl.cdiv(H, TR)
        in_block_bytes = TB * TR * W * itemsize
        acc_cols = W
        out_final_shape = (N, C, 1, out_cols)
    else:
        out_cols = (H - 1) // s0 + 1                            # H_out
        TB, TR = _plan_dim3(B, H, W, itemsize, target_block_bytes)
        in_specs = [pl.BlockSpec((TB, H, TR), lambda b, r: (b, 0, r))]
        if has_sel:
            sel = _selection_matrix(H, out_cols, 1, s0)
            inputs.append(sel)
            in_specs.append(pl.BlockSpec((H, out_cols), lambda b, r: (0, 0)))
            sel_bytes = int(sel.size) * 4
        kernel = functools.partial(
            _pool_reduce_w_kernel, TW=TR, W=W, inv_w=1.0 / float(W),
            has_sel=has_sel, ragged=(W % TR != 0))
        n_red = pl.cdiv(W, TR)
        in_block_bytes = TB * H * TR * itemsize
        acc_cols = H
        out_final_shape = (N, C, out_cols, 1)

    grid = (pl.cdiv(B, TB), n_red)

    # Size the scoped-VMEM request from the actual block footprint; only raise it
    # above the v5e 16 MiB scoped default when the blocks genuinely need it.
    out_block_bytes = TB * out_cols * itemsize
    scratch_bytes = TB * acc_cols * 4
    vmem_need = (2 * in_block_bytes + 2 * out_block_bytes + 2 * sel_bytes
                 + scratch_bytes + (1 << 20))
    compiler_kwargs = dict(dimension_semantics=("parallel", "arbitrary"))
    if vmem_need > 16 * 1024 * 1024:
        compiler_kwargs["vmem_limit_bytes"] = int(vmem_need)

    # Advisory: this call is bandwidth-bound.
    cost = pl.CostEstimate(
        flops=int(B * H * W),
        transcendentals=0,
        bytes_accessed=int(B * H * W * itemsize + B * out_cols * itemsize + sel_bytes))

    out = pl.pallas_call(
        kernel,
        out_shape=jax.ShapeDtypeStruct((B, out_cols), x.dtype),
        grid=grid,
        in_specs=in_specs,
        out_specs=pl.BlockSpec((TB, out_cols), lambda b, r: (b, 0)),
        scratch_shapes=[pltpu.VMEM((TB, acc_cols), jnp.float32)],
        compiler_params=pltpu.CompilerParams(**compiler_kwargs),
        cost_estimate=cost,
    )(*inputs)
    return out.reshape(out_final_shape)


# ----------------------------------------------------------------------------- tests


if __name__ == "__main__":
    key = jax.random.PRNGKey(0)
    N, C, H, W = 2, 4, 16, 16
    x = jax.random.normal(key, (N, C, H, W), dtype=jnp.float32)

    # T1: dim_to_pool == 2, defaults -> mean over H, shape (N, C, 1, W)
    out = avg_pool_2d_variable_input(x, dim_to_pool=2)
    jax.block_until_ready(out)
    ref = jnp.mean(x, axis=2, keepdims=True)
    assert out.shape == (N, C, 1, W), out.shape
    assert jnp.allclose(out, ref, atol=1e-5, rtol=1e-5)

    # T2: dim_to_pool == 3, defaults -> mean over W, shape (N, C, H, 1)
    out = avg_pool_2d_variable_input(x, dim_to_pool=3)
    jax.block_until_ready(out)
    ref = jnp.mean(x, axis=3, keepdims=True)
    assert out.shape == (N, C, H, 1), out.shape
    assert jnp.allclose(out, ref, atol=1e-5, rtol=1e-5)

    # T3: dim2, kernel_size=3, stride=(1,1): contiguous slice-add window path.
    k = 3
    out = avg_pool_2d_variable_input(x, dim_to_pool=2, kernel_size=k, stride=(1, 1))
    jax.block_until_ready(out)
    W_out = W - k + 1
    col = jnp.sum(x, axis=2)                                   # (N, C, W)
    ref = jnp.stack([col[..., o:o + k].sum(-1) for o in range(W_out)], axis=-1)
    ref = (ref / (k * H))[:, :, None, :]
    assert out.shape == (N, C, 1, W_out), out.shape
    assert jnp.allclose(out, ref, atol=1e-5, rtol=1e-5)

    # T4: dim2, kernel_size=2, stride=(2,1): strided window (selection-matmul path).
    k, s = 2, 2
    out = avg_pool_2d_variable_input(x, dim_to_pool=2, kernel_size=k, stride=(s, 1))
    jax.block_until_ready(out)
    W_out = (W - k) // s + 1
    ref = jnp.stack([col[..., o * s:o * s + k].sum(-1) for o in range(W_out)], axis=-1)
    ref = (ref / (k * H))[:, :, None, :]
    assert out.shape == (N, C, 1, W_out), out.shape
    assert jnp.allclose(out, ref, atol=2e-3, rtol=2e-3)

    # T5: dim3, stride=(2,1): strided row selection (selection-matmul path).
    s = 2
    out = avg_pool_2d_variable_input(x, dim_to_pool=3, stride=(s, 1))
    jax.block_until_ready(out)
    H_out = (H - 1) // s + 1
    ref = jnp.mean(x, axis=3, keepdims=True)[:, :, ::s]
    assert out.shape == (N, C, H_out, 1), out.shape
    assert jnp.allclose(out, ref, atol=2e-3, rtol=2e-3)

    # T6: bf16 input — dtype-aware planning + widening f32 accumulation.
    xb = x.astype(jnp.bfloat16)
    out = avg_pool_2d_variable_input(xb, dim_to_pool=2)
    jax.block_until_ready(out)
    ref = jnp.mean(xb.astype(jnp.float32), axis=2, keepdims=True).astype(jnp.bfloat16)
    assert out.shape == (N, C, 1, W), out.shape
    assert jnp.allclose(out.astype(jnp.float32), ref.astype(jnp.float32),
                        atol=2e-2, rtol=2e-2)

    # T7: tiled H-reduction path with ragged last H block (+ masking), forced via a
    # tiny block-size target (emulates the large-slab case).
    xr = jax.random.normal(jax.random.PRNGKey(1), (2, 4, 20, 16), dtype=jnp.float32)
    out = avg_pool_2d_variable_input(xr, dim_to_pool=2, target_block_bytes=4096)
    jax.block_until_ready(out)
    ref = jnp.mean(xr, axis=2, keepdims=True)
    assert out.shape == (2, 4, 1, 16), out.shape
    assert jnp.allclose(out, ref, atol=1e-5, rtol=1e-5)

    # T8: tiled W-reduction path with ragged last W block (+ masking).
    xw = jax.random.normal(jax.random.PRNGKey(2), (2, 4, 16, 160), dtype=jnp.float32)
    out = avg_pool_2d_variable_input(xw, dim_to_pool=3, target_block_bytes=64 * 1024)
    jax.block_until_ready(out)
    ref = jnp.mean(xw, axis=3, keepdims=True)
    assert out.shape == (2, 4, 16, 1), out.shape
    assert jnp.allclose(out, ref, atol=1e-5, rtol=1e-5)

    print("KERNEL_OK")
</pallas_src>

<mosaic_0001>
module attributes {stable_mosaic.version = 11 : i64} {
  func.func @_pool_reduce_h_kernel(%arg0: i32, %arg1: i32, %arg2: memref<8x16x16xf32, #tpu.memory_space<vmem>>, %arg3: memref<8x16xf32, #tpu.memory_space<vmem>>, %arg4: memref<8x16xf32, #tpu.memory_space<vmem>>) attributes {dimension_semantics = [#tpu.dimension_semantics<parallel>, #tpu.dimension_semantics<arbitrary>], iteration_bounds = array<i64: 1, 1>, scalar_prefetch = 0 : i64, scratch_operands = 1 : i64, tpu.core_type = #tpu.core_type<tc>, window_params = [{transform_indices = @transform_0, window_bounds = array<i64: 8, 16, 16>}, {transform_indices = @transform_1, window_bounds = array<i64: 8, 16>}]} {
    %c0_i32 = arith.constant 0 : i32
    %0 = arith.cmpi eq, %arg1, %c0_i32 : i32
    %1 = arith.extui %0 : i1 to i32
    %c0_i32_0 = arith.constant 0 : i32
    %2 = arith.cmpi ne, %1, %c0_i32_0 : i32
    scf.if %2 {
      %cst_9 = arith.constant 0.000000e+00 : f32
      %11 = vector.broadcast %cst_9 : f32 to vector<8x16xf32>
      %c0_10 = arith.constant 0 : index
      %c0_11 = arith.constant 0 : index
      %12 = vector.load %arg4[%c0_10, %c0_11] : memref<8x16xf32, #tpu.memory_space<vmem>>, vector<8x16xf32>
      tpu.vector_store %arg4[%c0_10, %c0_11], %11 {strides = array<i32>} : memref<8x16xf32, #tpu.memory_space<vmem>>, vector<8x16xf32>,
    } else {
    }
    %c0 = arith.constant 0 : index
    %c0_1 = arith.constant 0 : index
    %c0_2 = arith.constant 0 : index
    %3 = vector.load %arg2[%c0, %c0_1, %c0_2] : memref<8x16x16xf32, #tpu.memory_space<vmem>>, vector<8x16x16xf32>
    %c0_3 = arith.constant 0 : index
    %c0_4 = arith.constant 0 : index
    %4 = vector.load %arg4[%c0_3, %c0_4] : memref<8x16xf32, #tpu.memory_space<vmem>>, vector<8x16xf32>
    %cst = arith.constant dense<0.000000e+00> : vector<8x16xf32>
    %5 = vector.multi_reduction <add>, %3, %cst [1] : vector<8x16x16xf32> to vector<8x16xf32>
    %6 = arith.addf %4, %5 : vector<8x16xf32>
    %c0_5 = arith.constant 0 : index
    %c0_6 = arith.constant 0 : index
    %7 = vector.load %arg4[%c0_5, %c0_6] : memref<8x16xf32, #tpu.memory_space<vmem>>, vector<8x16xf32>
    tpu.vector_store %arg4[%c0_5, %c0_6], %6 {strides = array<i32>} : memref<8x16xf32, #tpu.memory_space<vmem>>, vector<8x16xf32>,
    %c0_i32_7 = arith.constant 0 : i32
    %8 = arith.cmpi eq, %arg1, %c0_i32_7 : i32
    %9 = arith.extui %8 : i1 to i32
    %c0_i32_8 = arith.constant 0 : i32
    %10 = arith.cmpi ne, %9, %c0_i32_8 : i32
    scf.if %10 {
      %c0_9 = arith.constant 0 : index
      %c0_10 = arith.constant 0 : index
      %11 = vector.load %arg4[%c0_9, %c0_10] : memref<8x16xf32, #tpu.memory_space<vmem>>, vector<8x16xf32>
      %cst_11 = arith.constant 6.250000e-02 : f32
      %12 = vector.broadcast %cst_11 : f32 to vector<8x16xf32>
      %13 = arith.mulf %11, %12 : vector<8x16xf32>
      %c0_12 = arith.constant 0 : index
      %c0_13 = arith.constant 0 : index
      %14 = vector.load %arg3[%c0_12, %c0_13] : memref<8x16xf32, #tpu.memory_space<vmem>>, vector<8x16xf32>
      tpu.vector_store %arg3[%c0_12, %c0_13], %13 {strides = array<i32>} : memref<8x16xf32, #tpu.memory_space<vmem>>, vector<8x16xf32>,
    } else {
    }
    return
  }
  func.func @transform_0(%arg0: i32, %arg1: i32) -> (i32, i32, i32) {
    %c0_i32 = arith.constant 0 : i32
    %c0_i32_0 = arith.constant 0 : i32
    return %arg0, %arg1, %c0_i32 : i32, i32, i32
  }
  func.func @transform_1(%arg0: i32, %arg1: i32) -> (i32, i32) {
    %c0_i32 = arith.constant 0 : i32
    %c0_i32_0 = arith.constant 0 : i32
    return %arg0, %c0_i32 : i32, i32
  }
}

</mosaic_0001>

<llo_original>
// kernel: tpu_custom_call.1
$region0: #{tpu_custom_call.1}
  #allocation0 [shape = 'u32[]', space=smem, size = 0x4, offset = 0x4, fixed_abs, tag = 'smem constant byte address 0x4 - core index']
  #allocation1 [shape = 'u32[144,128]{1,0:T(1,128)}', space=vmem, size = 0x12000, scoped, tag = 'internal scratch']
  #allocation2 [shape = 'f32[8,16]{1,0:T(8,128)}', space=vmem, size = 0x1000, scoped, tag = 'scratch operand']
  %s0 = inlined_call_operand.hbm [shape: f32[8,16,16], index: 0, kind: input, shape index: {}]
  %s1 = inlined_call_operand.hbm [shape: f32[8,16], index: 1, kind: output, shape index: {}]
  %s2 = sld [smem:[#allocation0]]
  $region26: #{tpu_custom_call.1} parent=0
    _
  %s4 = ssub.s32 1, %s2
  %s5 = scalar_select 0, %s4, %s2
  $region1: #{tpu_custom_call.1} parent=0
    #allocation3 [shape = 'u8[65536]{0}', space=vmem, size = 0x10000, scoped, tag = 'input window, operand 0, single buffered']
    #allocation4 [shape = 's32[1]{0}', space=sflag, size = 0x4, scoped, tag = 'scoped memory for tpu_custom_call.1']
    #allocation5 [shape = 's32[1]{0}', space=sflag, size = 0x4, scoped, tag = 'scoped memory for tpu_custom_call.1']
    #allocation6 [shape = 'u8[4096]{0}', space=vmem, size = 0x1000, scoped, tag = 'output window, operand 0, single buffered']
    %6 = vsyncpa [#allocation4], 0
    %7 = vsyncpa [#allocation5], 0
    // Predicated region
    $region2: #{tpu_custom_call.1} parent=1 // pred_check
      _
    $region3: #{tpu_custom_call.1} parent=1 // pred_check_branch
      %9 = sbr.rel (0) target = $region5
    $region4: #{tpu_custom_call.1} parent=1 // pred_region
      %s11 = ssub.s32 2048, 2048
      %12 = vsyncadd [#allocation4], %s11
      %s13 = sshll.u32 [#allocation3], 4
      %s14 = int_to_ptr.vmem [resolvable:$true] %s13
      %19 = dma.hbm_to_vmem [thread:$0]  %s0, 2048, %s14, [#allocation4], 128, 128, 8
    $region5: #{tpu_custom_call.1} parent=1 // pred_fallthru
      _
    // Predicated region
    $region6: #{tpu_custom_call.1} parent=1 // pred_check
      _
    $region7: #{tpu_custom_call.1} parent=1 // pred_check_branch
      %21 = sbr.rel (0) target = $region9
    $region8: #{tpu_custom_call.1} parent=1 // pred_region
      %22 = dma.done [#allocation4], 2048
    $region9: #{tpu_custom_call.1} parent=1 // pred_fallthru
      _
    %p23 = scmp.eq.s32.totalorder 0, 0
    // Predicated region
    $region10: #{tpu_custom_call.1} parent=1 // pred_check
      %p24 = pneg %p23
    $region11: #{tpu_custom_call.1} parent=1 // pred_check_branch
      %26 = sbr.rel (%p24) target = $region13
    $region12: #{tpu_custom_call.1} parent=1 // pred_region
      %vm27 = vcmask 130048
      %28 = vst.msk [vmem:[#allocation2] sm:$0xff] %vm27, 0.0
    $region13: #{tpu_custom_call.1} parent=1 // pred_fallthru
      _
    %v29 = vld [vmem:[#allocation3] sm:$0xff]
    %v30 = vld [vmem:[#allocation3 + $0x8] sm:$0xff]
    %v31 = vld [vmem:[#allocation3 + $0x10] sm:$0xff]
    %v32 = vld [vmem:[#allocation3 + $0x18] sm:$0xff]
    %v33 = vld [vmem:[#allocation3 + $0x20] sm:$0xff]
    %v34 = vld [vmem:[#allocation3 + $0x28] sm:$0xff]
    %v35 = vld [vmem:[#allocation3 + $0x30] sm:$0xff]
    %v36 = vld [vmem:[#allocation3 + $0x38] sm:$0xff]
    %v37 = vld [vmem:[#allocation3 + $0x40] sm:$0xff]
    %v38 = vld [vmem:[#allocation3 + $0x48] sm:$0xff]
    %v39 = vld [vmem:[#allocation3 + $0x50] sm:$0xff]
    %v40 = vld [vmem:[#allocation3 + $0x58] sm:$0xff]
    %v41 = vld [vmem:[#allocation3 + $0x60] sm:$0xff]
    %v42 = vld [vmem:[#allocation3 + $0x68] sm:$0xff]
    %v43 = vld [vmem:[#allocation3 + $0x70] sm:$0xff]
    %v44 = vld [vmem:[#allocation3 + $0x78] sm:$0xff]
    %v45 = vld [vmem:[#allocation2] sm:$0xff]
    %vm46 = vcmask 130048
    %v47 = vsel %vm46, %v29, 0.0
    %v48 = vsel %vm46, %v30, 0.0
    %v49 = vadd.f32 %v47, %v48
    %v50 = vrot.slane %v49, 4
    %v51 = vadd.f32 %v49, %v50
    %v52 = vrot.slane %v51, 2
    %v53 = vadd.f32 %v51, %v52
    %v54 = vrot.slane %v53, 1
    %v55 = vadd.f32 %v53, %v54
    %v56 = vsel %vm46, %v31, 0.0
    %v57 = vsel %vm46, %v32, 0.0
    %v58 = vadd.f32 %v56, %v57
    %v59 = vrot.slane %v58, 4
    %v60 = vadd.f32 %v58, %v59
    %v61 = vrot.slane %v60, 2
    %v62 = vadd.f32 %v60, %v61
    %v63 = vrot.slane %v62, 1
    %v64 = vadd.f32 %v62, %v63
    %v65 = vsel %vm46, %v33, 0.0
    %v66 = vsel %vm46, %v34, 0.0
    %v67 = vadd.f32 %v65, %v66
    %v68 = vrot.slane %v67, 4
    %v69 = vadd.f32 %v67, %v68
    %v70 = vrot.slane %v69, 2
    %v71 = vadd.f32 %v69, %v70
    %v72 = vrot.slane %v71, 1
    %v73 = vadd.f32 %v71, %v72
    %v74 = vsel %vm46, %v35, 0.0
    %v75 = vsel %vm46, %v36, 0.0
    %v76 = vadd.f32 %v74, %v75
    %v77 = vrot.slane %v76, 4
    %v78 = vadd.f32 %v76, %v77
    %v79 = vrot.slane %v78, 2
    %v80 = vadd.f32 %v78, %v79
    %v81 = vrot.slane %v80, 1
    %v82 = vadd.f32 %v80, %v81
    %v83 = vsel %vm46, %v37, 0.0
    %v84 = vsel %vm46, %v38, 0.0
    %v85 = vadd.f32 %v83, %v84
    %v86 = vrot.slane %v85, 4
    %v87 = vadd.f32 %v85, %v86
    %v88 = vrot.slane %v87, 2
    %v89 = vadd.f32 %v87, %v88
    %v90 = vrot.slane %v89, 1
    %v91 = vadd.f32 %v89, %v90
    %v92 = vsel %vm46, %v39, 0.0
    %v93 = vsel %vm46, %v40, 0.0
    %v94 = vadd.f32 %v92, %v93
    %v95 = vrot.slane %v94, 4
    %v96 = vadd.f32 %v94, %v95
    %v97 = vrot.slane %v96, 2
    %v98 = vadd.f32 %v96, %v97
    %v99 = vrot.slane %v98, 1
    %v100 = vadd.f32 %v98, %v99
    %v101 = vsel %vm46, %v41, 0.0
    %v102 = vsel %vm46, %v42, 0.0
    %v103 = vadd.f32 %v101, %v102
    %v104 = vrot.slane %v103, 4
    %v105 = vadd.f32 %v103, %v104
    %v106 = vrot.slane %v105, 2
    %v107 = vadd.f32 %v105, %v106
    %v108 = vrot.slane %v107, 1
    %v109 = vadd.f32 %v107, %v108
    %v110 = vsel %vm46, %v43, 0.0
    %v111 = vsel %vm46, %v44, 0.0
    %v112 = vadd.f32 %v110, %v111
    %v113 = vrot.slane %v112, 4
    %v114 = vadd.f32 %v112, %v113
    %v115 = vrot.slane %v114, 2
    %v116 = vadd.f32 %v114, %v115
    %v117 = vrot.slane %v116, 1
    %v118 = vadd.f32 %v116, %v117
    %vm127 = vcmask 1041409
    %v128 = vsel %vm127, %v64, %v55
    %vm129 = vcmask 1042434
    %v130 = vsel %vm129, %v73, %v128
    %vm131 = vcmask 1043459
    %v132 = vsel %vm131, %v82, %v130
    %vm133 = vcmask 1044484
    %v134 = vsel %vm133, %v91, %v132
    %vm135 = vcmask 1045509
    %v136 = vsel %vm135, %v100, %v134
    %vm137 = vcmask 1046534
    %v138 = vsel %vm137, %v109, %v136
    %vm139 = vcmask 1047559
    %v140 = vsel %vm139, %v118, %v138
    %v142 = vadd.f32 %v45, %v140
    %143 = vst.msk [vmem:[#allocation2] sm:$0xff] %vm46, %v142
    // Predicated region
    $region14: #{tpu_custom_call.1} parent=1 // pred_check
      %p144 = pneg %p23
    $region15: #{tpu_custom_call.1} parent=1 // pred_check_branch
      %146 = sbr.rel (%p144) target = $region17
    $region16: #{tpu_custom_call.1} parent=1 // pred_region
      %v147 = vld [vmem:[#allocation2] sm:$0xff]
      %v148 = vmul.f32 %v147, 0.0625
      %149 = vst.msk [vmem:[#allocation6] sm:$0xff] %vm46, %v148
    $region17: #{tpu_custom_call.1} parent=1 // pred_fallthru
      _
    // Predicated region
    $region18: #{tpu_custom_call.1} parent=1 // pred_check
      _
    $region19: #{tpu_custom_call.1} parent=1 // pred_check_branch
      %151 = sbr.rel (0) target = $region21
    $region20: #{tpu_custom_call.1} parent=1 // pred_region
      %s153 = ssub.s32 128, 128
      %154 = vsyncadd [#allocation5], %s153
      %s156 = sshll.u32 [#allocation6], 4
      %s157 = int_to_ptr.vmem [resolvable:$true] %s156
      %159 = dma.vmem_to_hbm [thread:$0]  %s157, 128, %s1, [#allocation5]
    $region21: #{tpu_custom_call.1} parent=1 // pred_fallthru
      _
    // Predicated region
    $region22: #{tpu_custom_call.1} parent=1 // pred_check
      _
    $region23: #{tpu_custom_call.1} parent=1 // pred_check_branch
      %161 = sbr.rel (0) target = $region25
    $region24: #{tpu_custom_call.1} parent=1 // pred_region
      %162 = dma.done [#allocation5], 128
    $region25: #{tpu_custom_call.1} parent=1 // pred_fallthru
      _
    %163 = vsyncpa [#allocation4], 1
    %164 = vsyncpa [#allocation5], 1

</llo_original>
